<compile_context>
chip_gen: v6e
topology: v6e:2x2x1
jax: 0.10.0
libtpu: 0.0.40
codegen_flags: <defaults>
</compile_context>

<pallas_src>
import numpy as np
import jax
import jax.numpy as jnp
from jax.experimental import pallas as pl
from jax.experimental.pallas import tpu as pltpu

# Unmasked taps of a 3x3 type-'B' PixelCNN mask (kh, kw); all others are zero.
_TAPS_B3 = ((0, 0), (0, 1), (0, 2), (1, 0), (1, 1))
_SUBLANE = 8          # f32 sublane width
_TARGET_LANES = 2048  # per-grid-step lane slab (>=512 lanes = good DMA/roofline regime)


def _make_kernel(W):
    def kernel(x_ref, w1_ref, b1_ref, wms_ref, bm_ref, w2_ref, b2_ref, mask_ref, o_ref):
        x = x_ref[...]                                     # (C, BP), pixels on lanes

        # ---- 1x1 conv (C -> Chp) + ReLU : single matmul ----
        h1 = jnp.dot(w1_ref[...], x, preferred_element_type=jnp.float32)
        h1 = jnp.maximum(h1 + b1_ref[...], 0.0)            # (Chp, BP)

        # ---- 3x3 masked 'B' conv, padding=1: one fat matmul over stacked,
        #      shifted copies of h1.  Shifts are XLU lane rolls; zero-padding at
        #      image borders (and cross-image roll wrap) is a precomputed per-tap
        #      mask from the wrapper — no in-kernel iota/mod/div VALU work. ----
        planes = []
        for t, (kh, kw) in enumerate(_TAPS_B3):
            dh, dw = kh - 1, kw - 1
            shift = -(dh * W + dw)                         # out[p] = h1[p + dh*W + dw]
            plane = h1 if shift == 0 else pltpu.roll(h1, shift, 1)
            if (dh, dw) != (0, 0):
                plane = plane * mask_ref[t]                # (Chp,BP) * (1,BP)
            planes.append(plane)
        a_stack = jnp.concatenate(planes, axis=0)          # (5*Chp, BP), aligned 8-sublane copies
        h2 = jnp.dot(wms_ref[...], a_stack, preferred_element_type=jnp.float32)
        h2 = jnp.maximum(h2 + bm_ref[...], 0.0)            # (Chp, BP)

        # ---- 1x1 conv (Chp -> C) + ReLU ----
        out = jnp.dot(w2_ref[...], h2, preferred_element_type=jnp.float32)
        out = jnp.maximum(out + b2_ref[...], 0.0)          # (C, BP)

        # ---- residual add (lane-dense store) ----
        o_ref[...] = x + out

    return kernel


def _boundary_masks(H, W, b_img):
    """Per-tap validity masks, periodic per image: (n_taps, 1, b_img*H*W) f32."""
    P = H * W
    lane = np.arange(P)
    col = lane % W
    row = lane // W
    rows = []
    for kh, kw in _TAPS_B3:
        dh, dw = kh - 1, kw - 1
        valid = np.ones(P, dtype=bool)
        if dh == -1:                # reads row y-1 -> need y >= 1
            valid &= row >= 1
        if dw == -1:                # reads col x-1 -> need x >= 1
            valid &= col >= 1
        elif dw == 1:               # reads col x+1 -> need x <= W-2
            valid &= col <= W - 2
        rows.append(valid)
    m = np.stack(rows).astype(np.float32)     # (nt, P)
    m = np.tile(m, (1, b_img))                # (nt, b_img*P)  (periodic -> also stops
    return m.reshape(len(_TAPS_B3), 1, b_img * P)  # cross-image leakage of the rolls)


def residual_masked_conv(x_nchw, w1, b1, wm, bm, w2, b2, *, target_lanes=_TARGET_LANES):
    """x_nchw: (N, C, H, W) f32 (PyTorch layout).
       Weights in PyTorch shapes: w1 (Ch, C, 1, 1), b1 (Ch,),
       wm (Ch, Ch, 3, 3) OIHW (already masked), bm (Ch,),
       w2 (C, Ch, 1, 1), b2 (C,)."""
    N, C, H, W = x_nchw.shape
    Ch = w1.shape[0]
    P = H * W
    nt = len(_TAPS_B3)

    # Pad hidden channels to the f32 sublane width (zero weights/biases -> exact).
    Chp = ((Ch + _SUBLANE - 1) // _SUBLANE) * _SUBLANE

    # Images per grid step: fill the lane axis so per-step grid/DMA overhead amortizes.
    b_img = max(1, min(N, target_lanes // P))
    n_steps = -(-N // b_img)
    N_pad = n_steps * b_img
    BP = b_img * P
    if n_steps > 1 and (BP % 128) != 0:
        # Fall back to one full-batch step so every block equals the full array
        # (avoids the (8,128) divisibility constraint for odd spatial sizes).
        b_img, n_steps, N_pad, BP = N, 1, N, N * P

    # --- host-side re-layout: (N,C,H,W) -> lane-dense (C, N_pad*P) slab ---
    x_flat = x_nchw.reshape(N, C, P).astype(jnp.float32)
    if N_pad != N:
        x_flat = jnp.pad(x_flat, ((0, N_pad - N), (0, 0), (0, 0)))
    x_slab = jnp.transpose(x_flat, (1, 0, 2)).reshape(C, N_pad * P)

    # --- one-time weight re-packing (host/XLA side), Ch -> Chp zero padding ---
    w1k = jnp.zeros((Chp, C), jnp.float32).at[:Ch, :].set(w1[:, :, 0, 0])
    wm_p = jnp.zeros((Chp, Chp, 3, 3), jnp.float32).at[:Ch, :Ch].set(wm)
    wms = jnp.concatenate([wm_p[:, :, kh, kw] for kh, kw in _TAPS_B3], axis=1)  # (Chp, nt*Chp)
    w2k = jnp.zeros((C, Chp), jnp.float32).at[:, :Ch].set(w2[:, :, 0, 0])
    b1k = jnp.zeros((Chp, 1), jnp.float32).at[:Ch, 0].set(b1)
    bmk = jnp.zeros((Chp, 1), jnp.float32).at[:Ch, 0].set(bm)
    b2k = b2.reshape(C, 1).astype(jnp.float32)

    masks = jnp.asarray(_boundary_masks(H, W, b_img))      # (nt, 1, BP)

    out = pl.pallas_call(
        _make_kernel(W),
        out_shape=jax.ShapeDtypeStruct((C, N_pad * P), jnp.float32),
        grid_spec=pltpu.PrefetchScalarGridSpec(
            num_scalar_prefetch=0,
            grid=(n_steps,),
            in_specs=[
                pl.BlockSpec((C, BP), lambda i: (0, i)),            # activation slab
                pl.BlockSpec((Chp, C), lambda i: (0, 0)),           # w1
                pl.BlockSpec((Chp, 1), lambda i: (0, 0)),           # b1
                pl.BlockSpec((Chp, nt * Chp), lambda i: (0, 0)),    # stacked masked-conv weight
                pl.BlockSpec((Chp, 1), lambda i: (0, 0)),           # bm
                pl.BlockSpec((C, Chp), lambda i: (0, 0)),           # w2
                pl.BlockSpec((C, 1), lambda i: (0, 0)),             # b2
                pl.BlockSpec((nt, 1, BP), lambda i: (0, 0, 0)),     # per-tap boundary masks
            ],
            out_specs=pl.BlockSpec((C, BP), lambda i: (0, i)),
        ),
        compiler_params=pltpu.CompilerParams(
            dimension_semantics=("parallel",)),   # lane-slab steps independent (megacore on v7x)
    )(x_slab, w1k, b1k, wms, bmk, w2k, b2k, masks)

    out = out.reshape(C, N_pad, P).transpose(1, 0, 2)[:N]
    return out.reshape(N, C, H, W)


def _ref_forward(x, w1, b1, wm, bm, w2, b2):
    """Pure-JAX NCHW reference for correctness checking."""
    dn = ("NCHW", "OIHW", "NCHW")
    prec = jax.lax.Precision.HIGHEST
    h = jax.lax.conv_general_dilated(x, w1, (1, 1), "VALID",
                                     dimension_numbers=dn, precision=prec)
    h = jnp.maximum(h + b1[None, :, None, None], 0.0)
    h = jax.lax.conv_general_dilated(h, wm, (1, 1), ((1, 1), (1, 1)),
                                     dimension_numbers=dn, precision=prec)
    h = jnp.maximum(h + bm[None, :, None, None], 0.0)
    h = jax.lax.conv_general_dilated(h, w2, (1, 1), "VALID",
                                     dimension_numbers=dn, precision=prec)
    h = jnp.maximum(h + b2[None, :, None, None], 0.0)
    return x + h


if __name__ == "__main__":
    # Small shapes: batch=2, channels=8 (input_num_dim == output_num_dim so the
    # residual add is well-defined), spatial=16x16.
    N, C, H, W = 2, 8, 16, 16
    Ch = C // 2

    key = jax.random.PRNGKey(0)
    ks = jax.random.split(key, 8)
    x_nchw = jax.random.normal(ks[0], (N, C, H, W), jnp.float32)

    # Deterministic synthetic parameters in PyTorch-native shapes.
    w1 = 0.2 * jax.random.normal(ks[1], (Ch, C, 1, 1), jnp.float32)       # Conv2d(C, C//2, 1)
    b1 = 0.1 * jax.random.normal(ks[2], (Ch,), jnp.float32)
    wm_raw = 0.2 * jax.random.normal(ks[3], (Ch, Ch, 3, 3), jnp.float32)  # MaskedConv2d 3x3 'B'
    bm = 0.1 * jax.random.normal(ks[4], (Ch,), jnp.float32)
    w2 = 0.2 * jax.random.normal(ks[5], (C, Ch, 1, 1), jnp.float32)       # Conv2d(C//2, C, 1)
    b2 = 0.1 * jax.random.normal(ks[6], (C,), jnp.float32)

    # Type-'B' mask for kernel_size=3 (matches MaskedConv2d.__init__, OIHW).
    mask = np.ones((Ch, Ch, 3, 3), np.float32)
    mask[:, :, 2:, :] = 0.0        # rows below center
    mask[:, :, 1, 2:] = 0.0        # columns strictly right of center on center row
    wm = wm_raw * jnp.asarray(mask)

    y = residual_masked_conv(x_nchw, w1, b1, wm, bm, w2, b2)
    y = jax.block_until_ready(y)

    # Correctness check against a pure-JAX reference.
    y_ref = _ref_forward(x_nchw, w1, b1, wm, bm, w2, b2)
    assert y.shape == (N, C, H, W)
    err = float(np.max(np.abs(np.asarray(y) - np.asarray(y_ref))))
    assert np.allclose(np.asarray(y), np.asarray(y_ref), rtol=2e-3, atol=2e-3), err

    print("KERNEL_OK")
</pallas_src>

<mosaic_0001>
module attributes {stable_mosaic.version = 11 : i64} {
  func.func @kernel(%arg0: i32, %arg1: memref<8x512xf32, #tpu.memory_space<vmem>>, %arg2: memref<8x8xf32, #tpu.memory_space<vmem>>, %arg3: memref<8x1xf32, #tpu.memory_space<vmem>>, %arg4: memref<8x40xf32, #tpu.memory_space<vmem>>, %arg5: memref<8x1xf32, #tpu.memory_space<vmem>>, %arg6: memref<8x8xf32, #tpu.memory_space<vmem>>, %arg7: memref<8x1xf32, #tpu.memory_space<vmem>>, %arg8: memref<5x1x512xf32, #tpu.memory_space<vmem>>, %arg9: memref<8x512xf32, #tpu.memory_space<vmem>>) attributes {dimension_semantics = [#tpu.dimension_semantics<parallel>], iteration_bounds = array<i64: 1>, scalar_prefetch = 0 : i64, scratch_operands = 0 : i64, tpu.core_type = #tpu.core_type<tc>, window_params = [{transform_indices = @transform_0, window_bounds = array<i64: 8, 512>}, {pipeline_mode = #tpu.pipeline_mode<synchronous>, transform_indices = @transform_1, window_bounds = array<i64: 8, 8>}, {pipeline_mode = #tpu.pipeline_mode<synchronous>, transform_indices = @transform_2, window_bounds = array<i64: 8, 1>}, {pipeline_mode = #tpu.pipeline_mode<synchronous>, transform_indices = @transform_3, window_bounds = array<i64: 8, 40>}, {pipeline_mode = #tpu.pipeline_mode<synchronous>, transform_indices = @transform_4, window_bounds = array<i64: 8, 1>}, {pipeline_mode = #tpu.pipeline_mode<synchronous>, transform_indices = @transform_5, window_bounds = array<i64: 8, 8>}, {pipeline_mode = #tpu.pipeline_mode<synchronous>, transform_indices = @transform_6, window_bounds = array<i64: 8, 1>}, {pipeline_mode = #tpu.pipeline_mode<synchronous>, transform_indices = @transform_7, window_bounds = array<i64: 5, 1, 512>}, {transform_indices = @transform_8, window_bounds = array<i64: 8, 512>}]} {
    %c0 = arith.constant 0 : index
    %c0_0 = arith.constant 0 : index
    %0 = vector.load %arg1[%c0, %c0_0] : memref<8x512xf32, #tpu.memory_space<vmem>>, vector<8x512xf32>
    %c0_1 = arith.constant 0 : index
    %c0_2 = arith.constant 0 : index
    %1 = vector.load %arg2[%c0_1, %c0_2] : memref<8x8xf32, #tpu.memory_space<vmem>>, vector<8x8xf32>
    %cst = arith.constant dense<0.000000e+00> : vector<8x512xf32>
    %2 = tpu.matmul %1, %0, %cst {dimension_numbers = #tpu.dot_dimension_numbers<[1], [0], [0], [1], [0, 0, 1, 1], [], []>} : vector<8x8xf32>, vector<8x512xf32>, vector<8x512xf32> -> vector<8x512xf32>
    %c0_3 = arith.constant 0 : index
    %c0_4 = arith.constant 0 : index
    %3 = vector.load %arg3[%c0_3, %c0_4] : memref<8x1xf32, #tpu.memory_space<vmem>>, vector<8x1xf32>
    %4 = vector.broadcast %3 : vector<8x1xf32> to vector<8x512xf32>
    %5 = arith.addf %2, %4 : vector<8x512xf32>
    %cst_5 = arith.constant 0.000000e+00 : f32
    %6 = vector.broadcast %cst_5 : f32 to vector<8x512xf32>
    %7 = arith.maximumf %5, %6 : vector<8x512xf32>
    %c17_i32 = arith.constant 17 : i32
    %8 = tpu.dynamic_rotate %7 by %c17_i32 dim 1 : vector<8x512xf32>, i32 -> vector<8x512xf32>
    %c0_6 = arith.constant 0 : index
    %c0_7 = arith.constant 0 : index
    %c0_8 = arith.constant 0 : index
    %9 = vector.load %arg8[%c0_6, %c0_7, %c0_8] : memref<5x1x512xf32, #tpu.memory_space<vmem>>, vector<1x1x512xf32>
    %10 = vector.shape_cast %9 : vector<1x1x512xf32> to vector<1x512xf32>
    %11 = vector.broadcast %10 : vector<1x512xf32> to vector<8x512xf32>
    %12 = arith.mulf %8, %11 : vector<8x512xf32>
    %c16_i32 = arith.constant 16 : i32
    %13 = tpu.dynamic_rotate %7 by %c16_i32 dim 1 : vector<8x512xf32>, i32 -> vector<8x512xf32>
    %c1 = arith.constant 1 : index
    %c0_9 = arith.constant 0 : index
    %c0_10 = arith.constant 0 : index
    %14 = vector.load %arg8[%c1, %c0_9, %c0_10] : memref<5x1x512xf32, #tpu.memory_space<vmem>>, vector<1x1x512xf32>
    %15 = vector.shape_cast %14 : vector<1x1x512xf32> to vector<1x512xf32>
    %16 = vector.broadcast %15 : vector<1x512xf32> to vector<8x512xf32>
    %17 = arith.mulf %13, %16 : vector<8x512xf32>
    %c15_i32 = arith.constant 15 : i32
    %18 = tpu.dynamic_rotate %7 by %c15_i32 dim 1 : vector<8x512xf32>, i32 -> vector<8x512xf32>
    %c2 = arith.constant 2 : index
    %c0_11 = arith.constant 0 : index
    %c0_12 = arith.constant 0 : index
    %19 = vector.load %arg8[%c2, %c0_11, %c0_12] : memref<5x1x512xf32, #tpu.memory_space<vmem>>, vector<1x1x512xf32>
    %20 = vector.shape_cast %19 : vector<1x1x512xf32> to vector<1x512xf32>
    %21 = vector.broadcast %20 : vector<1x512xf32> to vector<8x512xf32>
    %22 = arith.mulf %18, %21 : vector<8x512xf32>
    %c1_i32 = arith.constant 1 : i32
    %23 = tpu.dynamic_rotate %7 by %c1_i32 dim 1 : vector<8x512xf32>, i32 -> vector<8x512xf32>
    %c3 = arith.constant 3 : index
    %c0_13 = arith.constant 0 : index
    %c0_14 = arith.constant 0 : index
    %24 = vector.load %arg8[%c3, %c0_13, %c0_14] : memref<5x1x512xf32, #tpu.memory_space<vmem>>, vector<1x1x512xf32>
    %25 = vector.shape_cast %24 : vector<1x1x512xf32> to vector<1x512xf32>
    %26 = vector.broadcast %25 : vector<1x512xf32> to vector<8x512xf32>
    %27 = arith.mulf %23, %26 : vector<8x512xf32>
    %28 = tpu.concatenate %12, %17, %22, %27, %7 in 0 : vector<8x512xf32>, vector<8x512xf32>, vector<8x512xf32>, vector<8x512xf32>, vector<8x512xf32> -> vector<40x512xf32>
    %c0_15 = arith.constant 0 : index
    %c0_16 = arith.constant 0 : index
    %29 = vector.load %arg4[%c0_15, %c0_16] : memref<8x40xf32, #tpu.memory_space<vmem>>, vector<8x40xf32>
    %cst_17 = arith.constant dense<0.000000e+00> : vector<8x512xf32>
    %30 = tpu.matmul %29, %28, %cst_17 {dimension_numbers = #tpu.dot_dimension_numbers<[1], [0], [0], [1], [0, 0, 1, 1], [], []>} : vector<8x40xf32>, vector<40x512xf32>, vector<8x512xf32> -> vector<8x512xf32>
    %c0_18 = arith.constant 0 : index
    %c0_19 = arith.constant 0 : index
    %31 = vector.load %arg5[%c0_18, %c0_19] : memref<8x1xf32, #tpu.memory_space<vmem>>, vector<8x1xf32>
    %32 = vector.broadcast %31 : vector<8x1xf32> to vector<8x512xf32>
    %33 = arith.addf %30, %32 : vector<8x512xf32>
    %cst_20 = arith.constant 0.000000e+00 : f32
    %34 = vector.broadcast %cst_20 : f32 to vector<8x512xf32>
    %35 = arith.maximumf %33, %34 : vector<8x512xf32>
    %c0_21 = arith.constant 0 : index
    %c0_22 = arith.constant 0 : index
    %36 = vector.load %arg6[%c0_21, %c0_22] : memref<8x8xf32, #tpu.memory_space<vmem>>, vector<8x8xf32>
    %cst_23 = arith.constant dense<0.000000e+00> : vector<8x512xf32>
    %37 = tpu.matmul %36, %35, %cst_23 {dimension_numbers = #tpu.dot_dimension_numbers<[1], [0], [0], [1], [0, 0, 1, 1], [], []>} : vector<8x8xf32>, vector<8x512xf32>, vector<8x512xf32> -> vector<8x512xf32>
    %c0_24 = arith.constant 0 : index
    %c0_25 = arith.constant 0 : index
    %38 = vector.load %arg7[%c0_24, %c0_25] : memref<8x1xf32, #tpu.memory_space<vmem>>, vector<8x1xf32>
    %39 = vector.broadcast %38 : vector<8x1xf32> to vector<8x512xf32>
    %40 = arith.addf %37, %39 : vector<8x512xf32>
    %cst_26 = arith.constant 0.000000e+00 : f32
    %41 = vector.broadcast %cst_26 : f32 to vector<8x512xf32>
    %42 = arith.maximumf %40, %41 : vector<8x512xf32>
    %43 = arith.addf %0, %42 : vector<8x512xf32>
    %c0_27 = arith.constant 0 : index
    %c0_28 = arith.constant 0 : index
    %44 = vector.load %arg9[%c0_27, %c0_28] : memref<8x512xf32, #tpu.memory_space<vmem>>, vector<8x512xf32>
    tpu.vector_store %arg9[%c0_27, %c0_28], %43 {strides = array<i32>} : memref<8x512xf32, #tpu.memory_space<vmem>>, vector<8x512xf32>,
    return
  }
  func.func @transform_0(%arg0: i32) -> (i32, i32) {
    %c0_i32 = arith.constant 0 : i32
    %c0_i32_0 = arith.constant 0 : i32
    return %c0_i32, %arg0 : i32, i32
  }
  func.func @transform_1(%arg0: i32) -> (i32, i32) {
    %c0_i32 = arith.constant 0 : i32
    %c0_i32_0 = arith.constant 0 : i32
    %c0_i32_1 = arith.constant 0 : i32
    return %c0_i32, %c0_i32_0 : i32, i32
  }
  func.func @transform_2(%arg0: i32) -> (i32, i32) {
    %c0_i32 = arith.constant 0 : i32
    %c0_i32_0 = arith.constant 0 : i32
    %c0_i32_1 = arith.constant 0 : i32
    return %c0_i32, %c0_i32_0 : i32, i32
  }
  func.func @transform_3(%arg0: i32) -> (i32, i32) {
    %c0_i32 = arith.constant 0 : i32
    %c0_i32_0 = arith.constant 0 : i32
    %c0_i32_1 = arith.constant 0 : i32
    return %c0_i32, %c0_i32_0 : i32, i32
  }
  func.func @transform_4(%arg0: i32) -> (i32, i32) {
    %c0_i32 = arith.constant 0 : i32
    %c0_i32_0 = arith.constant 0 : i32
    %c0_i32_1 = arith.constant 0 : i32
    return %c0_i32, %c0_i32_0 : i32, i32
  }
  func.func @transform_5(%arg0: i32) -> (i32, i32) {
    %c0_i32 = arith.constant 0 : i32
    %c0_i32_0 = arith.constant 0 : i32
    %c0_i32_1 = arith.constant 0 : i32
    return %c0_i32, %c0_i32_0 : i32, i32
  }
  func.func @transform_6(%arg0: i32) -> (i32, i32) {
    %c0_i32 = arith.constant 0 : i32
    %c0_i32_0 = arith.constant 0 : i32
    %c0_i32_1 = arith.constant 0 : i32
    return %c0_i32, %c0_i32_0 : i32, i32
  }
  func.func @transform_7(%arg0: i32) -> (i32, i32, i32) {
    %c0_i32 = arith.constant 0 : i32
    %c0_i32_0 = arith.constant 0 : i32
    %c0_i32_1 = arith.constant 0 : i32
    %c0_i32_2 = arith.constant 0 : i32
    return %c0_i32, %c0_i32_0, %c0_i32_1 : i32, i32, i32
  }
  func.func @transform_8(%arg0: i32) -> (i32, i32) {
    %c0_i32 = arith.constant 0 : i32
    %c0_i32_0 = arith.constant 0 : i32
    return %c0_i32, %arg0 : i32, i32
  }
}

</mosaic_0001>

<llo_original>
// kernel: tpu_custom_call.1
$region0: #{tpu_custom_call.1}
  #allocation0 [shape = 'u32[]', space=smem, size = 0x4, offset = 0x4, fixed_abs, tag = 'smem constant byte address 0x4 - core index']
  #allocation1 [shape = 'u32[144,128]{1,0:T(1,128)}', space=vmem, size = 0x12000, scoped, tag = 'internal scratch']
  %s0 = inlined_call_operand.hbm [shape: f32[8,512], index: 0, kind: input, shape index: {}]
  %s1 = inlined_call_operand.vmem [shape: f32[8,8], index: 1, kind: input, shape index: {}]
  %s2 = inlined_call_operand.vmem [shape: f32[8,1], index: 2, kind: input, shape index: {}]
  %s3 = inlined_call_operand.vmem [shape: f32[8,40], index: 3, kind: input, shape index: {}]
  %s4 = inlined_call_operand.vmem [shape: f32[8,1], index: 4, kind: input, shape index: {}]
  %s5 = inlined_call_operand.hbm [shape: f32[8,8], index: 5, kind: input, shape index: {}]
  %s6 = inlined_call_operand.vmem [shape: f32[8,1], index: 6, kind: input, shape index: {}]
  %s7 = inlined_call_operand.vmem [shape: f32[5,1,512], index: 7, kind: input, shape index: {}]
  %s8 = inlined_call_operand.hbm [shape: f32[8,512], index: 8, kind: output, shape index: {}]
  %s9 = sld [smem:[#allocation0]]
  $region50: #{tpu_custom_call.1} parent=0
    _
  %s11 = ssub.s32 1, %s9
  %s12 = scalar_select 0, %s11, %s9
  $region1: #{tpu_custom_call.1} parent=0
    #allocation2 [shape = 'u8[16384]{0}', space=vmem, size = 0x4000, scoped, tag = 'input window, operand 0, single buffered']
    #allocation3 [shape = 's32[1]{0}', space=sflag, size = 0x4, scoped, tag = 'scoped memory for tpu_custom_call.1']
    #allocation4 [shape = 's32[1]{0}', space=sflag, size = 0x4, scoped, tag = 'scoped memory for tpu_custom_call.1']
    #allocation5 [shape = 'u8[4096]{0}', space=vmem, size = 0x1000, scoped, tag = 'input window, operand 5, single buffered']
    #allocation6 [shape = 's32[1]{0}', space=sflag, size = 0x4, scoped, tag = 'scoped memory for tpu_custom_call.1']
    #allocation7 [shape = 'u8[16384]{0}', space=vmem, size = 0x4000, scoped, tag = 'output window, operand 0, single buffered']
    %13 = vsyncpa [#allocation3], 0
    %14 = vsyncpa [#allocation6], 0
    %15 = vsyncpa [#allocation4], 0
    // Predicated region
    $region2: #{tpu_custom_call.1} parent=1 // pred_check
      _
    $region3: #{tpu_custom_call.1} parent=1 // pred_check_branch
      %17 = sbr.rel (0) target = $region5
    $region4: #{tpu_custom_call.1} parent=1 // pred_region
      %s19 = ssub.s32 512, 512
      %20 = vsyncadd [#allocation3], %s19
      %s22 = sshll.u32 [#allocation2], 4
      %s23 = int_to_ptr.vmem [resolvable:$true] %s22
      %25 = dma.hbm_to_vmem [thread:$0]  %s0, 512, %s23, [#allocation3]
    $region5: #{tpu_custom_call.1} parent=1 // pred_fallthru
      _
    // Predicated region
    $region6: #{tpu_custom_call.1} parent=1 // pred_check
      _
    $region7: #{tpu_custom_call.1} parent=1 // pred_check_branch
      %27 = sbr.rel (0) target = $region9
    $region8: #{tpu_custom_call.1} parent=1 // pred_region
      _
    $region9: #{tpu_custom_call.1} parent=1 // pred_fallthru
      _
    // Predicated region
    $region10: #{tpu_custom_call.1} parent=1 // pred_check
      _
    $region11: #{tpu_custom_call.1} parent=1 // pred_check_branch
      %29 = sbr.rel (0) target = $region13
    $region12: #{tpu_custom_call.1} parent=1 // pred_region
      _
    $region13: #{tpu_custom_call.1} parent=1 // pred_fallthru
      _
    // Predicated region
    $region14: #{tpu_custom_call.1} parent=1 // pred_check
      _
    $region15: #{tpu_custom_call.1} parent=1 // pred_check_branch
      %31 = sbr.rel (0) target = $region17
    $region16: #{tpu_custom_call.1} parent=1 // pred_region
      _
    $region17: #{tpu_custom_call.1} parent=1 // pred_fallthru
      _
    // Predicated region
    $region18: #{tpu_custom_call.1} parent=1 // pred_check
      _
    $region19: #{tpu_custom_call.1} parent=1 // pred_check_branch
      %33 = sbr.rel (0) target = $region21
    $region20: #{tpu_custom_call.1} parent=1 // pred_region
      _
    $region21: #{tpu_custom_call.1} parent=1 // pred_fallthru
      _
    // Predicated region
    $region22: #{tpu_custom_call.1} parent=1 // pred_check
      _
    $region23: #{tpu_custom_call.1} parent=1 // pred_check_branch
      %35 = sbr.rel (0) target = $region25
    $region24: #{tpu_custom_call.1} parent=1 // pred_region
      %s37 = ssub.s32 128, 128
      %38 = vsyncadd [#allocation6], %s37
      %s40 = sshll.u32 [#allocation5], 4
      %s41 = int_to_ptr.vmem [resolvable:$true] %s40
      %43 = dma.hbm_to_vmem [thread:$0]  %s5, 128, %s41, [#allocation6]
    $region25: #{tpu_custom_call.1} parent=1 // pred_fallthru
      _
    // Predicated region
    $region26: #{tpu_custom_call.1} parent=1 // pred_check
      _
    $region27: #{tpu_custom_call.1} parent=1 // pred_check_branch
      %45 = sbr.rel (0) target = $region29
    $region28: #{tpu_custom_call.1} parent=1 // pred_region
      _
    $region29: #{tpu_custom_call.1} parent=1 // pred_fallthru
      _
    // Predicated region
    $region30: #{tpu_custom_call.1} parent=1 // pred_check
      _
    $region31: #{tpu_custom_call.1} parent=1 // pred_check_branch
      %47 = sbr.rel (0) target = $region33
    $region32: #{tpu_custom_call.1} parent=1 // pred_region
      _
    $region33: #{tpu_custom_call.1} parent=1 // pred_fallthru
      _
    // Predicated region
    $region34: #{tpu_custom_call.1} parent=1 // pred_check
      _
    $region35: #{tpu_custom_call.1} parent=1 // pred_check_branch
      %49 = sbr.rel (0) target = $region37
    $region36: #{tpu_custom_call.1} parent=1 // pred_region
      %50 = dma.done [#allocation3], 512
    $region37: #{tpu_custom_call.1} parent=1 // pred_fallthru
      _
    // Predicated region
    $region38: #{tpu_custom_call.1} parent=1 // pred_check
      _
    $region39: #{tpu_custom_call.1} parent=1 // pred_check_branch
      %52 = sbr.rel (0) target = $region41
    $region40: #{tpu_custom_call.1} parent=1 // pred_region
      %53 = dma.done [#allocation6], 128
    $region41: #{tpu_custom_call.1} parent=1 // pred_fallthru
      _
    %v54 = vld [vmem:[#allocation2] sm:$0xff]
    %v55 = vld [vmem:[#allocation2 + $0x8] sm:$0xff]
    %v56 = vld [vmem:[#allocation2 + $0x10] sm:$0xff]
    %v57 = vld [vmem:[#allocation2 + $0x18] sm:$0xff]
    %v58 = vld [vmem:[%s1] sm:$0xff]
    %v59 = vld [vmem:[%s2] sm:$0xff]
    %61 = vset.pattern.permute.xlu0 0
    %62 = vperm.xlu0 %61, %v59
    %v63 = vpop.permute.xlu0 %62
    %vm65 = vcmask 64512
    %v67 = vsel %vm65, %v58, 0
    %69 = vmatprep.subr.mxu0 0.0
    %70 = vmatpush1.msra.mxu0 0.0
    %71 = vmatprep.subr.mxu0 0.0
    %72 = vmatpush1.msra.mxu0 0.0
    %73 = vmatprep.subr.mxu0 0.0
    %74 = vmatpush1.msra.mxu0 0.0
    %75 = vmatprep.subr.mxu0 0.0
    %76 = vmatpush1.msra.mxu0 0.0
    %77 = vmatprep.subr.mxu0 0.0
    %78 = vmatpush1.msra.mxu0 0.0
    %79 = vmatprep.subr.mxu0 0.0
    %80 = vmatpush1.msra.mxu0 0.0
    %81 = vmatprep.subr.mxu0 0.0
    %82 = vmatpush1.msra.mxu0 0.0
    %83 = vmatprep.subr.mxu0 0.0
    %84 = vmatpush1.msra.mxu0 0.0
    %85 = vmatprep.subr.mxu0 0.0
    %86 = vmatpush1.msra.mxu0 0.0
    %87 = vmatprep.subr.mxu0 0.0
    %88 = vmatpush1.msra.mxu0 0.0
    %89 = vmatprep.subr.mxu0 0.0
    %90 = vmatpush1.msra.mxu0 0.0
    %91 = vmatprep.subr.mxu0 0.0
    %92 = vmatpush1.msra.mxu0 0.0
    %93 = vmatprep.subr.mxu0 0.0
    %94 = vmatpush1.msra.mxu0 0.0
    %95 = vmatprep.subr.mxu0 0.0
    %96 = vmatpush1.msra.mxu0 0.0
    %97 = vmatprep.subr.mxu0 0.0
    %98 = vmatpush1.msra.mxu0 0.0
    %99 = vmatprep.subr.mxu0 %v55
    %100 = vmatpush1.msra.mxu0 %v54
    %101 = vmatprep.subr.mxu0 0.0
    %102 = vmatpush2.msra.mxu0 0.0
    %103 = vmatprep.subr.mxu0 0.0
    %104 = vmatpush2.msra.mxu0 0.0
    %105 = vmatprep.subr.mxu0 0.0
    %106 = vmatpush2.msra.mxu0 0.0
    %107 = vmatprep.subr.mxu0 0.0
    %108 = vmatpush2.msra.mxu0 0.0
    %109 = vmatprep.subr.mxu0 0.0
    %110 = vmatpush2.msra.mxu0 0.0
    %111 = vmatprep.subr.mxu0 0.0
    %112 = vmatpush2.msra.mxu0 0.0
    %113 = vmatprep.subr.mxu0 0.0
    %114 = vmatpush2.msra.mxu0 0.0
    %115 = vmatprep.subr.mxu0 0.0
    %116 = vmatpush2.msra.mxu0 0.0
    %117 = vmatprep.subr.mxu0 0.0
    %118 = vmatpush2.msra.mxu0 0.0
    %119 = vmatprep.subr.mxu0 0.0
    %120 = vmatpush2.msra.mxu0 0.0
    %121 = vmatprep.subr.mxu0 0.0
    %122 = vmatpush2.msra.mxu0 0.0
    %123 = vmatprep.subr.mxu0 0.0
    %124 = vmatpush2.msra.mxu0 0.0
    %125 = vmatprep.subr.mxu0 0.0
    %126 = vmatpush2.msra.mxu0 0.0
    %127 = vmatprep.subr.mxu0 0.0
    %128 = vmatpush2.msra.mxu0 0.0
    %129 = vmatprep.subr.mxu0 0.0
    %130 = vmatpush2.msra.mxu0 0.0
    %131 = vmatprep.subr.mxu0 0.0
    %132 = vmatpush2.msra.mxu0 0.0
    %133 = vmatprep.mubr.f32.mxu0 0.0
    %134 = vmatmul.mubr.f32.gmra.mxu0 %v67
    %v135 = vpop.f32.mrf.mxu0
    %v136 = vadd.f32 %v63, %v135
    %v137 = vpop.f32.mrf.mxu0
    %v138 = vadd.f32 %v63, %v137
    %139 = vdwg.mxu0
    %140 = vmatprep.subr.mxu0 0.0
    %141 = vmatpush1.msra.mxu0 0.0
    %142 = vmatprep.subr.mxu0 0.0
    %143 = vmatpush1.msra.mxu0 0.0
    %144 = vmatprep.subr.mxu0 0.0
    %145 = vmatpush1.msra.mxu0 0.0
    %146 = vmatprep.subr.mxu0 0.0
    %147 = vmatpush1.msra.mxu0 0.0
    %148 = vmatprep.subr.mxu0 0.0
    %149 = vmatpush1.msra.mxu0 0.0
    %150 = vmatprep.subr.mxu0 0.0
    %151 = vmatpush1.msra.mxu0 0.0
    %152 = vmatprep.subr.mxu0 0.0
    %153 = vmatpush1.msra.mxu0 0.0
    %154 = vmatprep.subr.mxu0 0.0
    %155 = vmatpush1.msra.mxu0 0.0
    %156 = vmatprep.subr.mxu0 0.0
    %157 = vmatpush1.msra.mxu0 0.0
    %158 = vmatprep.subr.mxu0 0.0
    %159 = vmatpush1.msra.mxu0 0.0
    %160 = vmatprep.subr.mxu0 0.0
    %161 = vmatpush1.msra.mxu0 0.0
    %162 = vmatprep.subr.mxu0 0.0
    %163 = vmatpush1.msra.mxu0 0.0
    %164 = vmatprep.subr.mxu0 0.0
    %165 = vmatpush1.msra.mxu0 0.0
    %166 = vmatprep.subr.mxu0 0.0
    %167 = vmatpush1.msra.mxu0 0.0
    %168 = vmatprep.subr.mxu0 0.0
    %169 = vmatpush1.msra.mxu0 0.0
    %170 = vmatprep.subr.mxu0 %v57
    %171 = vmatpush1.msra.mxu0 %v56
    %172 = vmatprep.subr.mxu0 0.0
    %173 = vmatpush2.msra.mxu0 0.0
    %174 = vmatprep.subr.mxu0 0.0
    %175 = vmatpush2.msra.mxu0 0.0
    %176 = vmatprep.subr.mxu0 0.0
    %177 = vmatpush2.msra.mxu0 0.0
    %178 = vmatprep.subr.mxu0 0.0
    %179 = vmatpush2.msra.mxu0 0.0
    %180 = vmatprep.subr.mxu0 0.0
    %181 = vmatpush2.msra.mxu0 0.0
    %182 = vmatprep.subr.mxu0 0.0
    %183 = vmatpush2.msra.mxu0 0.0
    %184 = vmatprep.subr.mxu0 0.0
    %185 = vmatpush2.msra.mxu0 0.0
    %186 = vmatprep.subr.mxu0 0.0
    %187 = vmatpush2.msra.mxu0 0.0
    %188 = vmatprep.subr.mxu0 0.0
    %189 = vmatpush2.msra.mxu0 0.0
    %190 = vmatprep.subr.mxu0 0.0
    %191 = vmatpush2.msra.mxu0 0.0
    %192 = vmatprep.subr.mxu0 0.0
    %193 = vmatpush2.msra.mxu0 0.0
    %194 = vmatprep.subr.mxu0 0.0
    %195 = vmatpush2.msra.mxu0 0.0
    %196 = vmatprep.subr.mxu0 0.0
    %197 = vmatpush2.msra.mxu0 0.0
    %198 = vmatprep.subr.mxu0 0.0
    %199 = vmatpush2.msra.mxu0 0.0
    %200 = vmatprep.subr.mxu0 0.0
    %201 = vmatpush2.msra.mxu0 0.0
    %202 = vmatprep.subr.mxu0 0.0
    %203 = vmatpush2.msra.mxu0 0.0
    %204 = vmatprep.mubr.f32.mxu0 0.0
    %205 = vmatmul.mubr.f32.gmra.mxu0 %v67
    %v206 = vpop.f32.mrf.mxu0
    %v207 = vadd.f32 %v63, %v206
    %v208 = vpop.f32.mrf.mxu0
    %v209 = vadd.f32 %v63, %v208
    %210 = vdwg.mxu0
    %v211 = vmax.f32 %v136, 0.0
    %v212 = vmax.f32 %v138, 0.0
    %v213 = vmax.f32 %v207, 0.0
    %v214 = vmax.f32 %v209, 0.0
    %215 = vrot.lane.b32.xlu0 %v211, 17
    %v216 = vpop.permute.xlu0 %215
    %217 = vrot.lane.b32.xlu0 %v212, 17
    %v218 = vpop.permute.xlu0 %217
    %219 = vrot.lane.b32.xlu0 %v213, 17
    %v220 = vpop.permute.xlu0 %219
    %221 = vrot.lane.b32.xlu0 %v214, 17
    %v222 = vpop.permute.xlu0 %221
    %v223 = vlaneseq
    %v224 = vand.u32 %v223, 127
    %vm225 = vcmp.lt.s32.totalorder %v224, 17
    %v226 = vsel %vm225, %v220, %v222
    %v227 = vsel %vm225, %v218, %v220
    %v228 = vsel %vm225, %v216, %v218
    %v229 = vsel %vm225, %v222, %v216
    %v230 = vld [vmem:[%s7] sm:$0xf]
    %v232 = vlaneseq
    %v233 = vshrl.u32 %v232, 7
    %v234 = vsub.s32 0, %v233
    %v235 = vrot.slane %v230, %v234
    %v236 = vlaneseq
    %v237 = vshrl.u32 %v236, 7
    %v238 = vsub.s32 1, %v237
    %v239 = vrot.slane %v230, %v238
    %v240 = vlaneseq
    %v241 = vshrl.u32 %v240, 7
    %v242 = vsub.s32 2, %v241
    %v243 = vrot.slane %v230, %v242
    %v244 = vlaneseq
    %v245 = vshrl.u32 %v244, 7
    %v246 = vsub.s32 3, %v245
    %v247 = vrot.slane %v230, %v246
    %v252 = vmul.f32 %v229, %v235
    %v253 = vmul.f32 %v228, %v239
    %v254 = vmul.f32 %v227, %v243
    %v255 = vmul.f32 %v226, %v247
    %256 = vrot.lane.b32.xlu0 %v211, 16
    %v257 = vpop.permute.xlu0 %256
    %258 = vrot.lane.b32.xlu0 %v212, 16
    %v259 = vpop.permute.xlu0 %258
    %260 = vrot.lane.b32.xlu0 %v213, 16
    %v261 = vpop.permute.xlu0 %260
    %262 = vrot.lane.b32.xlu0 %v214, 16
    %v263 = vpop.permute.xlu0 %262
    %vm264 = vcmp.lt.s32.totalorder %v224, 16
    %v265 = vsel %vm264, %v261, %v263
    %v266 = vsel %vm264, %v259, %v261
    %v267 = vsel %vm264, %v257, %v259
    %v268 = vsel %vm264, %v263, %v257
    %s269 = scalar_lea.vmem %s7, 4
    %v270 = vld [vmem:[%s269] sm:$0xf]
    %v272 = vlaneseq
    %v273 = vshrl.u32 %v272, 7
    %v274 = vsub.s32 0, %v273
    %v275 = vrot.slane %v270, %v274
    %v276 = vlaneseq
    %v277 = vshrl.u32 %v276, 7
    %v278 = vsub.s32 1, %v277
    %v279 = vrot.slane %v270, %v278
    %v280 = vlaneseq
    %v281 = vshrl.u32 %v280, 7
    %v282 = vsub.s32 2, %v281
    %v283 = vrot.slane %v270, %v282
    %v284 = vlaneseq
    %v285 = vshrl.u32 %v284, 7
    %v286 = vsub.s32 3, %v285
    %v287 = vrot.slane %v270, %v286
    %v292 = vmul.f32 %v268, %v275
    %v293 = vmul.f32 %v267, %v279
    %v294 = vmul.f32 %v266, %v283
    %v295 = vmul.f32 %v265, %v287
    %296 = vrot.lane.b32.xlu0 %v211, 15
    %v297 = vpop.permute.xlu0 %296
    %298 = vrot.lane.b32.xlu0 %v212, 15
    %v299 = vpop.permute.xlu0 %298
    %300 = vrot.lane.b32.xlu0 %v213, 15
    %v301 = vpop.permute.xlu0 %300
    %302 = vrot.lane.b32.xlu0 %v214, 15
    %v303 = vpop.permute.xlu0 %302
    %vm304 = vcmp.lt.s32.totalorder %v224, 15
    %v305 = vsel %vm304, %v301, %v303
    %v306 = vsel %vm304, %v299, %v301
    %v307 = vsel %vm304, %v297, %v299
    %v308 = vsel %vm304, %v303, %v297
    %s309 = scalar_lea.vmem %s7, 8
    %v310 = vld [vmem:[%s309] sm:$0xf]
    %v312 = vlaneseq
    %v313 = vshrl.u32 %v312, 7
    %v314 = vsub.s32 0, %v313
    %v315 = vrot.slane %v310, %v314
    %v316 = vlaneseq
    %v317 = vshrl.u32 %v316, 7
    %v318 = vsub.s32 1, %v317
    %v319 = vrot.slane %v310, %v318
    %v320 = vlaneseq
    %v321 = vshrl.u32 %v320, 7
    %v322 = vsub.s32 2, %v321
    %v323 = vrot.slane %v310, %v322
    %v324 = vlaneseq
    %v325 = vshrl.u32 %v324, 7
    %v326 = vsub.s32 3, %v325
    %v327 = vrot.slane %v310, %v326
    %v332 = vmul.f32 %v308, %v315
    %v333 = vmul.f32 %v307, %v319
    %v334 = vmul.f32 %v306, %v323
    %v335 = vmul.f32 %v305, %v327
    %336 = vrot.lane.b32.xlu0 %v211, 1
    %v337 = vpop.permute.xlu0 %336
    %338 = vrot.lane.b32.xlu0 %v212, 1
    %v339 = vpop.permute.xlu0 %338
    %340 = vrot.lane.b32.xlu0 %v213, 1
    %v341 = vpop.permute.xlu0 %340
    %342 = vrot.lane.b32.xlu0 %v214, 1
    %v343 = vpop.permute.xlu0 %342
    %vm344 = vcmp.lt.s32.totalorder %v224, 1
    %v345 = vsel %vm344, %v341, %v343
    %v346 = vsel %vm344, %v339, %v341
    %v347 = vsel %vm344, %v337, %v339
    %v348 = vsel %vm344, %v343, %v337
    %s349 = scalar_lea.vmem %s7, 12
    %v350 = vld [vmem:[%s349] sm:$0xf]
    %v352 = vlaneseq
    %v353 = vshrl.u32 %v352, 7
    %v354 = vsub.s32 0, %v353
    %v355 = vrot.slane %v350, %v354
    %v356 = vlaneseq
    %v357 = vshrl.u32 %v356, 7
    %v358 = vsub.s32 1, %v357
    %v359 = vrot.slane %v350, %v358
    %v360 = vlaneseq
    %v361 = vshrl.u32 %v360, 7
    %v362 = vsub.s32 2, %v361
    %v363 = vrot.slane %v350, %v362
    %v364 = vlaneseq
    %v365 = vshrl.u32 %v364, 7
    %v366 = vsub.s32 3, %v365
    %v367 = vrot.slane %v350, %v366
    %v372 = vmul.f32 %v348, %v355
    %v373 = vmul.f32 %v347, %v359
    %v374 = vmul.f32 %v346, %v363
    %v375 = vmul.f32 %v345, %v367
    %v376 = vld [vmem:[%s3] sm:$0xff]
    %v377 = vld [vmem:[%s4] sm:$0xff]
    %379 = vset.pattern.permute.xlu0 0
    %380 = vperm.xlu0 %379, %v377
    %v381 = vpop.permute.xlu0 %380
    %vm383 = vcmask 326656
    %v385 = vsel %vm383, %v376, 0
    %387 = vmatprep.subr.mxu0 0.0
    %388 = vmatpush1.msra.mxu0 0.0
    %389 = vmatprep.subr.mxu0 0.0
    %390 = vmatpush1.msra.mxu0 0.0
    %391 = vmatprep.subr.mxu0 0.0
    %392 = vmatpush1.msra.mxu0 0.0
    %393 = vmatprep.subr.mxu0 0.0
    %394 = vmatpush1.msra.mxu0 0.0
    %395 = vmatprep.subr.mxu0 0.0
    %396 = vmatpush1.msra.mxu0 0.0
    %397 = vmatprep.subr.mxu0 0.0
    %398 = vmatpush1.msra.mxu0 0.0
    %399 = vmatprep.subr.mxu0 0.0
    %400 = vmatpush1.msra.mxu0 0.0
    %401 = vmatprep.subr.mxu0 0.0
    %402 = vmatpush1.msra.mxu0 0.0
    %403 = vmatprep.subr.mxu0 0.0
    %404 = vmatpush1.msra.mxu0 0.0
    %405 = vmatprep.subr.mxu0 0.0
    %406 = vmatpush1.msra.mxu0 0.0
    %407 = vmatprep.subr.mxu0 0.0
    %408 = vmatpush1.msra.mxu0 0.0
    %409 = vmatprep.subr.mxu0 %v212
    %410 = vmatpush1.msra.mxu0 %v211
    %411 = vmatprep.subr.mxu0 %v373
    %412 = vmatpush1.msra.mxu0 %v372
    %413 = vmatprep.subr.mxu0 %v333
    %414 = vmatpush1.msra.mxu0 %v332
    %415 = vmatprep.subr.mxu0 %v293
    %416 = vmatpush1.msra.mxu0 %v292
    %417 = vmatprep.subr.mxu0 %v253
    %418 = vmatpush1.msra.mxu0 %v252
    %419 = vmatprep.subr.mxu0 0.0
    %420 = vmatpush2.msra.mxu0 0.0
    %421 = vmatprep.subr.mxu0 0.0
    %422 = vmatpush2.msra.mxu0 0.0
    %423 = vmatprep.subr.mxu0 0.0
    %424 = vmatpush2.msra.mxu0 0.0
    %425 = vmatprep.subr.mxu0 0.0
    %426 = vmatpush2.msra.mxu0 0.0
    %427 = vmatprep.subr.mxu0 0.0
    %428 = vmatpush2.msra.mxu0 0.0
    %429 = vmatprep.subr.mxu0 0.0
    %430 = vmatpush2.msra.mxu0 0.0
    %431 = vmatprep.subr.mxu0 0.0
    %432 = vmatpush2.msra.mxu0 0.0
    %433 = vmatprep.subr.mxu0 0.0
    %434 = vmatpush2.msra.mxu0 0.0
    %435 = vmatprep.subr.mxu0 0.0
    %436 = vmatpush2.msra.mxu0 0.0
    %437 = vmatprep.subr.mxu0 0.0
    %438 = vmatpush2.msra.mxu0 0.0
    %439 = vmatprep.subr.mxu0 0.0
    %440 = vmatpush2.msra.mxu0 0.0
    %441 = vmatprep.subr.mxu0 0.0
    %442 = vmatpush2.msra.mxu0 0.0
    %443 = vmatprep.subr.mxu0 0.0
    %444 = vmatpush2.msra.mxu0 0.0
    %445 = vmatprep.subr.mxu0 0.0
    %446 = vmatpush2.msra.mxu0 0.0
    %447 = vmatprep.subr.mxu0 0.0
    %448 = vmatpush2.msra.mxu0 0.0
    %449 = vmatprep.subr.mxu0 0.0
    %450 = vmatpush2.msra.mxu0 0.0
    %451 = vmatprep.mubr.f32.mxu0 0.0
    %452 = vmatmul.mubr.f32.gmra.mxu0 %v385
    %v453 = vpop.f32.mrf.mxu0
    %v454 = vadd.f32 %v381, %v453
    %v455 = vpop.f32.mrf.mxu0
    %v456 = vadd.f32 %v381, %v455
    %457 = vdwg.mxu0
    %458 = vmatprep.subr.mxu0 0.0
    %459 = vmatpush1.msra.mxu0 0.0
    %460 = vmatprep.subr.mxu0 0.0
    %461 = vmatpush1.msra.mxu0 0.0
    %462 = vmatprep.subr.mxu0 0.0
    %463 = vmatpush1.msra.mxu0 0.0
    %464 = vmatprep.subr.mxu0 0.0
    %465 = vmatpush1.msra.mxu0 0.0
    %466 = vmatprep.subr.mxu0 0.0
    %467 = vmatpush1.msra.mxu0 0.0
    %468 = vmatprep.subr.mxu0 0.0
    %469 = vmatpush1.msra.mxu0 0.0
    %470 = vmatprep.subr.mxu0 0.0
    %471 = vmatpush1.msra.mxu0 0.0
    %472 = vmatprep.subr.mxu0 0.0
    %473 = vmatpush1.msra.mxu0 0.0
    %474 = vmatprep.subr.mxu0 0.0
    %475 = vmatpush1.msra.mxu0 0.0
    %476 = vmatprep.subr.mxu0 0.0
    %477 = vmatpush1.msra.mxu0 0.0
    %478 = vmatprep.subr.mxu0 0.0
    %479 = vmatpush1.msra.mxu0 0.0
    %480 = vmatprep.subr.mxu0 %v214
    %481 = vmatpush1.msra.mxu0 %v213
    %482 = vmatprep.subr.mxu0 %v375
    %483 = vmatpush1.msra.mxu0 %v374
    %484 = vmatprep.subr.mxu0 %v335
    %485 = vmatpush1.msra.mxu0 %v334
    %486 = vmatprep.subr.mxu0 %v295
    %487 = vmatpush1.msra.mxu0 %v294
    %488 = vmatprep.subr.mxu0 %v255
    %489 = vmatpush1.msra.mxu0 %v254
    %490 = vmatprep.subr.mxu0 0.0
    %491 = vmatpush2.msra.mxu0 0.0
    %492 = vmatprep.subr.mxu0 0.0
    %493 = vmatpush2.msra.mxu0 0.0
    %494 = vmatprep.subr.mxu0 0.0
    %495 = vmatpush2.msra.mxu0 0.0
    %496 = vmatprep.subr.mxu0 0.0
    %497 = vmatpush2.msra.mxu0 0.0
    %498 = vmatprep.subr.mxu0 0.0
    %499 = vmatpush2.msra.mxu0 0.0
    %500 = vmatprep.subr.mxu0 0.0
    %501 = vmatpush2.msra.mxu0 0.0
    %502 = vmatprep.subr.mxu0 0.0
    %503 = vmatpush2.msra.mxu0 0.0
    %504 = vmatprep.subr.mxu0 0.0
    %505 = vmatpush2.msra.mxu0 0.0
    %506 = vmatprep.subr.mxu0 0.0
    %507 = vmatpush2.msra.mxu0 0.0
    %508 = vmatprep.subr.mxu0 0.0
    %509 = vmatpush2.msra.mxu0 0.0
    %510 = vmatprep.subr.mxu0 0.0
    %511 = vmatpush2.msra.mxu0 0.0
    %512 = vmatprep.subr.mxu0 0.0
    %513 = vmatpush2.msra.mxu0 0.0
    %514 = vmatprep.subr.mxu0 0.0
    %515 = vmatpush2.msra.mxu0 0.0
    %516 = vmatprep.subr.mxu0 0.0
    %517 = vmatpush2.msra.mxu0 0.0
    %518 = vmatprep.subr.mxu0 0.0
    %519 = vmatpush2.msra.mxu0 0.0
    %520 = vmatprep.subr.mxu0 0.0
    %521 = vmatpush2.msra.mxu0 0.0
    %522 = vmatprep.mubr.f32.mxu0 0.0
    %523 = vmatmul.mubr.f32.gmra.mxu0 %v385
    %v524 = vpop.f32.mrf.mxu0
    %v525 = vadd.f32 %v381, %v524
    %v526 = vpop.f32.mrf.mxu0
    %v527 = vadd.f32 %v381, %v526
    %528 = vdwg.mxu0
    %v529 = vmax.f32 %v454, 0.0
    %v530 = vmax.f32 %v456, 0.0
    %v531 = vmax.f32 %v525, 0.0
    %v532 = vmax.f32 %v527, 0.0
    %v533 = vld [vmem:[#allocation5] sm:$0xff]
    %v534 = vld [vmem:[%s6] sm:$0xff]
    %536 = vset.pattern.permute.xlu0 0
    %537 = vperm.xlu0 %536, %v534
    %v538 = vpop.permute.xlu0 %537
    %v541 = vsel %vm65, %v533, 0
    %543 = vmatprep.subr.mxu0 0.0
    %544 = vmatpush1.msra.mxu0 0.0
    %545 = vmatprep.subr.mxu0 0.0
    %546 = vmatpush1.msra.mxu0 0.0
    %547 = vmatprep.subr.mxu0 0.0
    %548 = vmatpush1.msra.mxu0 0.0
    %549 = vmatprep.subr.mxu0 0.0
    %550 = vmatpush1.msra.mxu0 0.0
    %551 = vmatprep.subr.mxu0 0.0
    %552 = vmatpush1.msra.mxu0 0.0
    %553 = vmatprep.subr.mxu0 0.0
    %554 = vmatpush1.msra.mxu0 0.0
    %555 = vmatprep.subr.mxu0 0.0
    %556 = vmatpush1.msra.mxu0 0.0
    %557 = vmatprep.subr.mxu0 0.0
    %558 = vmatpush1.msra.mxu0 0.0
    %559 = vmatprep.subr.mxu0 0.0
    %560 = vmatpush1.msra.mxu0 0.0
    %561 = vmatprep.subr.mxu0 0.0
    %562 = vmatpush1.msra.mxu0 0.0
    %563 = vmatprep.subr.mxu0 0.0
    %564 = vmatpush1.msra.mxu0 0.0
    %565 = vmatprep.subr.mxu0 0.0
    %566 = vmatpush1.msra.mxu0 0.0
    %567 = vmatprep.subr.mxu0 0.0
    %568 = vmatpush1.msra.mxu0 0.0
    %569 = vmatprep.subr.mxu0 0.0
    %570 = vmatpush1.msra.mxu0 0.0
    %571 = vmatprep.subr.mxu0 0.0
    %572 = vmatpush1.msra.mxu0 0.0
    %573 = vmatprep.subr.mxu0 %v530
    %574 = vmatpush1.msra.mxu0 %v529
    %575 = vmatprep.subr.mxu0 0.0
    %576 = vmatpush2.msra.mxu0 0.0
    %577 = vmatprep.subr.mxu0 0.0
    %578 = vmatpush2.msra.mxu0 0.0
    %579 = vmatprep.subr.mxu0 0.0
    %580 = vmatpush2.msra.mxu0 0.0
    %581 = vmatprep.subr.mxu0 0.0
    %582 = vmatpush2.msra.mxu0 0.0
    %583 = vmatprep.subr.mxu0 0.0
    %584 = vmatpush2.msra.mxu0 0.0
    %585 = vmatprep.subr.mxu0 0.0
    %586 = vmatpush2.msra.mxu0 0.0
    %587 = vmatprep.subr.mxu0 0.0
    %588 = vmatpush2.msra.mxu0 0.0
    %589 = vmatprep.subr.mxu0 0.0
    %590 = vmatpush2.msra.mxu0 0.0
    %591 = vmatprep.subr.mxu0 0.0
    %592 = vmatpush2.msra.mxu0 0.0
    %593 = vmatprep.subr.mxu0 0.0
    %594 = vmatpush2.msra.mxu0 0.0
    %595 = vmatprep.subr.mxu0 0.0
    %596 = vmatpush2.msra.mxu0 0.0
    %597 = vmatprep.subr.mxu0 0.0
    %598 = vmatpush2.msra.mxu0 0.0
    %599 = vmatprep.subr.mxu0 0.0
    %600 = vmatpush2.msra.mxu0 0.0
    %601 = vmatprep.subr.mxu0 0.0
    %602 = vmatpush2.msra.mxu0 0.0
    %603 = vmatprep.subr.mxu0 0.0
    %604 = vmatpush2.msra.mxu0 0.0
    %605 = vmatprep.subr.mxu0 0.0
    %606 = vmatpush2.msra.mxu0 0.0
    %607 = vmatprep.mubr.f32.mxu0 0.0
    %608 = vmatmul.mubr.f32.gmra.mxu0 %v541
    %v609 = vpop.f32.mrf.mxu0
    %v610 = vadd.f32 %v538, %v609
    %v611 = vpop.f32.mrf.mxu0
    %v612 = vadd.f32 %v538, %v611
    %613 = vdwg.mxu0
    %614 = vmatprep.subr.mxu0 0.0
    %615 = vmatpush1.msra.mxu0 0.0
    %616 = vmatprep.subr.mxu0 0.0
    %617 = vmatpush1.msra.mxu0 0.0
    %618 = vmatprep.subr.mxu0 0.0
    %619 = vmatpush1.msra.mxu0 0.0
    %620 = vmatprep.subr.mxu0 0.0
    %621 = vmatpush1.msra.mxu0 0.0
    %622 = vmatprep.subr.mxu0 0.0
    %623 = vmatpush1.msra.mxu0 0.0
    %624 = vmatprep.subr.mxu0 0.0
    %625 = vmatpush1.msra.mxu0 0.0
    %626 = vmatprep.subr.mxu0 0.0
    %627 = vmatpush1.msra.mxu0 0.0
    %628 = vmatprep.subr.mxu0 0.0
    %629 = vmatpush1.msra.mxu0 0.0
    %630 = vmatprep.subr.mxu0 0.0
    %631 = vmatpush1.msra.mxu0 0.0
    %632 = vmatprep.subr.mxu0 0.0
    %633 = vmatpush1.msra.mxu0 0.0
    %634 = vmatprep.subr.mxu0 0.0
    %635 = vmatpush1.msra.mxu0 0.0
    %636 = vmatprep.subr.mxu0 0.0
    %637 = vmatpush1.msra.mxu0 0.0
    %638 = vmatprep.subr.mxu0 0.0
    %639 = vmatpush1.msra.mxu0 0.0
    %640 = vmatprep.subr.mxu0 0.0
    %641 = vmatpush1.msra.mxu0 0.0
    %642 = vmatprep.subr.mxu0 0.0
    %643 = vmatpush1.msra.mxu0 0.0
    %644 = vmatprep.subr.mxu0 %v532
    %645 = vmatpush1.msra.mxu0 %v531
    %646 = vmatprep.subr.mxu0 0.0
    %647 = vmatpush2.msra.mxu0 0.0
    %648 = vmatprep.subr.mxu0 0.0
    %649 = vmatpush2.msra.mxu0 0.0
    %650 = vmatprep.subr.mxu0 0.0
    %651 = vmatpush2.msra.mxu0 0.0
    %652 = vmatprep.subr.mxu0 0.0
    %653 = vmatpush2.msra.mxu0 0.0
    %654 = vmatprep.subr.mxu0 0.0
    %655 = vmatpush2.msra.mxu0 0.0
    %656 = vmatprep.subr.mxu0 0.0
    %657 = vmatpush2.msra.mxu0 0.0
    %658 = vmatprep.subr.mxu0 0.0
    %659 = vmatpush2.msra.mxu0 0.0
    %660 = vmatprep.subr.mxu0 0.0
    %661 = vmatpush2.msra.mxu0 0.0
    %662 = vmatprep.subr.mxu0 0.0
    %663 = vmatpush2.msra.mxu0 0.0
    %664 = vmatprep.subr.mxu0 0.0
    %665 = vmatpush2.msra.mxu0 0.0
    %666 = vmatprep.subr.mxu0 0.0
    %667 = vmatpush2.msra.mxu0 0.0
    %668 = vmatprep.subr.mxu0 0.0
    %669 = vmatpush2.msra.mxu0 0.0
    %670 = vmatprep.subr.mxu0 0.0
    %671 = vmatpush2.msra.mxu0 0.0
    %672 = vmatprep.subr.mxu0 0.0
    %673 = vmatpush2.msra.mxu0 0.0
    %674 = vmatprep.subr.mxu0 0.0
    %675 = vmatpush2.msra.mxu0 0.0
    %676 = vmatprep.subr.mxu0 0.0
    %677 = vmatpush2.msra.mxu0 0.0
    %678 = vmatprep.mubr.f32.mxu0 0.0
    %679 = vmatmul.mubr.f32.gmra.mxu0 %v541
    %v680 = vpop.f32.mrf.mxu0
    %v681 = vadd.f32 %v538, %v680
    %v682 = vpop.f32.mrf.mxu0
    %v683 = vadd.f32 %v538, %v682
    %684 = vdwg.mxu0
    %v685 = vmax.f32 %v610, 0.0
    %v686 = vmax.f32 %v612, 0.0
    %v687 = vmax.f32 %v681, 0.0
    %v688 = vmax.f32 %v683, 0.0
    %v689 = vadd.f32 %v54, %v685
    %v690 = vadd.f32 %v55, %v686
    %v691 = vadd.f32 %v56, %v687
    %v692 = vadd.f32 %v57, %v688
    %693 = vst [vmem:[#allocation7] sm:$0xff] %v689
    %694 = vst [vmem:[#allocation7 + $0x8] sm:$0xff] %v690
    %695 = vst [vmem:[#allocation7 + $0x10] sm:$0xff] %v691
    %696 = vst [vmem:[#allocation7 + $0x18] sm:$0xff] %v692
    // Predicated region
    $region42: #{tpu_custom_call.1} parent=1 // pred_check
      _
    $region43: #{tpu_custom_call.1} parent=1 // pred_check_branch
      %698 = sbr.rel (0) target = $region45
    $region44: #{tpu_custom_call.1} parent=1 // pred_region
      %s700 = ssub.s32 512, 512
      %701 = vsyncadd [#allocation4], %s700
      %s703 = sshll.u32 [#allocation7], 4
      %s704 = int_to_ptr.vmem [resolvable:$true] %s703
      %706 = dma.vmem_to_hbm [thread:$0]  %s704, 512, %s8, [#allocation4]
    $region45: #{tpu_custom_call.1} parent=1 // pred_fallthru
      _
    // Predicated region
    $region46: #{tpu_custom_call.1} parent=1 // pred_check
      _
    $region47: #{tpu_custom_call.1} parent=1 // pred_check_branch
      %708 = sbr.rel (0) target = $region49
    $region48: #{tpu_custom_call.1} parent=1 // pred_region
      %709 = dma.done [#allocation4], 512
    $region49: #{tpu_custom_call.1} parent=1 // pred_fallthru
      _
    %710 = vsyncpa [#allocation3], 1
    %711 = vsyncpa [#allocation6], 1
    %712 = vsyncpa [#allocation4], 1

</llo_original>
